<compile_context>
chip_gen: v6e
topology: v6e:2x2x1
jax: 0.10.0
libtpu: 0.0.40
codegen_flags: <defaults>
</compile_context>

<pallas_src>
import jax
import jax.numpy as jnp
from jax.experimental import pallas as pl
from jax.experimental.pallas import tpu as pltpu


def patch_proj_kernel(x_ref, w_ref, b_ref, o_ref):
    # x_ref: (TM, K_pad) bf16 patches, w_ref: (K_pad, E_pad) bf16 (VMEM-resident),
    # b_ref: (1, E_pad) f32 bias. Accumulate in f32 on the MXU, add bias, store.
    acc = jnp.dot(x_ref[...], w_ref[...], preferred_element_type=jnp.float32)
    o_ref[...] = (acc + b_ref[...]).astype(o_ref.dtype)


def _round_up(v, m):
    return (v + m - 1) // m * m


def patch_embed_forward(x, weight, bias, tubelet_size, patch_size,
                        out_dtype=jnp.float32):
    """x: (N, C, T, H, W) f32; weight: (E, C, kt, ph, pw) f32; bias: (E,) f32.

    Returns (N, E, T//kt, H//ph, W//pw), matching nn.Conv3d(kernel==stride).
    """
    N, C, T, H, W = x.shape
    E = weight.shape[0]
    kt = tubelet_size
    ph, pw = patch_size
    Tp, Hp, Wp = T // kt, H // ph, W // pw
    K = C * kt * ph * pw
    M = N * Tp * Hp * Wp

    # --- alignment / tile sizes ---
    K_pad = _round_up(K, 128)          # lane-aligned contraction dim
    E_pad = _round_up(E, 128)          # full-width, lane-dense output columns
    M16 = _round_up(M, 16)             # bf16 sublane packing: 16 rows / vreg
    TM = min(512, M16)                 # big M stripes amortize per-step overhead
    grid_m = pl.cdiv(M16, TM)          # ragged last block handled by Pallas

    # --- glue: patchify + bf16 cast in one fusion, zero-pad to aligned shapes ---
    xp = x.reshape(N, C, Tp, kt, Hp, ph, Wp, pw)
    xp = xp.transpose(0, 2, 4, 6, 1, 3, 5, 7).reshape(M, K).astype(jnp.bfloat16)
    xp = jnp.pad(xp, ((0, M16 - M), (0, K_pad - K)))

    w2d = weight.reshape(E, K).T.astype(jnp.bfloat16)              # (K, E)
    w2d = jnp.pad(w2d, ((0, K_pad - K), (0, E_pad - E)))           # zero pad
    b2d = jnp.pad(bias.reshape(1, E).astype(jnp.float32),
                  ((0, 0), (0, E_pad - E)))

    out_bytes = jnp.dtype(out_dtype).itemsize
    # double-buffered x/out tiles + resident weight + bias, with 2x headroom,
    # capped at 48 MiB (v7x per-TC VMEM is 64 MiB; leave compiler scratch room).
    tile_bytes = (2 * TM * K_pad * 2          # x tiles (2 buffers, bf16)
                  + 2 * K_pad * E_pad * 2     # weight (resident; 2 bufs alloc'd)
                  + 2 * TM * E_pad * out_bytes  # out tiles
                  + 2 * E_pad * 4)            # bias
    vmem_limit = int(min(max(2 * tile_bytes, 16 * 1024 * 1024), 48 * 1024 * 1024))

    # --- Pallas kernel: 1-D grid over M, weight/bias VMEM-resident ---
    out = pl.pallas_call(
        patch_proj_kernel,
        out_shape=jax.ShapeDtypeStruct((M16, E_pad), out_dtype),
        grid_spec=pltpu.PrefetchScalarGridSpec(
            num_scalar_prefetch=0,
            grid=(grid_m,),
            in_specs=[
                pl.BlockSpec((TM, K_pad), lambda i: (i, 0)),        # x stripe
                pl.BlockSpec((K_pad, E_pad), lambda i: (0, 0)),     # weight, resident
                pl.BlockSpec((1, E_pad), lambda i: (0, 0)),         # bias, resident
            ],
            out_specs=pl.BlockSpec((TM, E_pad), lambda i: (i, 0)),
        ),
        compiler_params=pltpu.CompilerParams(
            dimension_semantics=("parallel",),
            vmem_limit_bytes=vmem_limit,
        ),
    )(xp, w2d, b2d)

    # --- glue: drop padding, back to Conv3d output layout (N, E, T', H', W') ---
    out = out[:M, :E].reshape(N, Tp, Hp, Wp, E).transpose(0, 4, 1, 2, 3)
    return out


if __name__ == "__main__":
    # Small shapes consistent with PatchEmbed:
    #   img_size=16, patch_size=8, kernel_size(tubelet)=2, in_chans=1, embed_dim=32
    N, C, T, H, W = 2, 1, 2, 16, 16
    kt, ph, pw = 2, 8, 8
    E = 32

    key = jax.random.PRNGKey(0)
    kx, kw, kb = jax.random.split(key, 3)
    x = jax.random.normal(kx, (N, C, T, H, W), dtype=jnp.float32)
    # deterministic param init (Conv3d weight shape: (E, C, kt, ph, pw))
    fan_in = C * kt * ph * pw
    bound = 1.0 / (fan_in ** 0.5)
    weight = jax.random.uniform(kw, (E, C, kt, ph, pw), jnp.float32, -bound, bound)
    bias = jax.random.uniform(kb, (E,), jnp.float32, -bound, bound)

    out = patch_embed_forward(x, weight, bias, kt, (ph, pw))
    out = jax.block_until_ready(out)

    # sanity check vs XLA conv. Reference uses bf16-rounded inputs (the kernel
    # feeds the MXU bf16 with f32 accumulation), so differences are only
    # accumulation-order level.
    x_ref = x.astype(jnp.bfloat16).astype(jnp.float32)
    w_ref = weight.astype(jnp.bfloat16).astype(jnp.float32)
    ref = jax.lax.conv_general_dilated(
        x_ref, w_ref, window_strides=(kt, ph, pw), padding="VALID",
        dimension_numbers=("NCDHW", "OIDHW", "NCDHW"),
    ) + bias.reshape(1, E, 1, 1, 1)
    assert out.shape == (N, E, T // kt, H // ph, W // pw)
    assert jnp.allclose(out, ref, atol=1e-3, rtol=1e-3)

    print("KERNEL_OK")
</pallas_src>

<mosaic_0001>
module attributes {stable_mosaic.version = 11 : i64} {
  func.func @patch_proj_kernel(%arg0: i32, %arg1: memref<16x128xbf16, #tpu.memory_space<vmem>>, %arg2: memref<128x128xbf16, #tpu.memory_space<vmem>>, %arg3: memref<1x128xf32, #tpu.memory_space<vmem>>, %arg4: memref<16x128xf32, #tpu.memory_space<vmem>>) attributes {dimension_semantics = [#tpu.dimension_semantics<parallel>], iteration_bounds = array<i64: 1>, scalar_prefetch = 0 : i64, scratch_operands = 0 : i64, tpu.core_type = #tpu.core_type<tc>, window_params = [{transform_indices = @transform_0, window_bounds = array<i64: 16, 128>}, {pipeline_mode = #tpu.pipeline_mode<synchronous>, transform_indices = @transform_1, window_bounds = array<i64: 128, 128>}, {pipeline_mode = #tpu.pipeline_mode<synchronous>, transform_indices = @transform_2, window_bounds = array<i64: 1, 128>}, {transform_indices = @transform_3, window_bounds = array<i64: 16, 128>}]} {
    %c0 = arith.constant 0 : index
    %c0_0 = arith.constant 0 : index
    %0 = vector.load %arg1[%c0, %c0_0] : memref<16x128xbf16, #tpu.memory_space<vmem>>, vector<16x128xbf16>
    %c0_1 = arith.constant 0 : index
    %c0_2 = arith.constant 0 : index
    %1 = vector.load %arg2[%c0_1, %c0_2] : memref<128x128xbf16, #tpu.memory_space<vmem>>, vector<128x128xbf16>
    %cst = arith.constant dense<0.000000e+00> : vector<16x128xf32>
    %2 = tpu.matmul %0, %1, %cst {dimension_numbers = #tpu.dot_dimension_numbers<[1], [0], [0], [1], [0, 0, 1, 1], [], []>} : vector<16x128xbf16>, vector<128x128xbf16>, vector<16x128xf32> -> vector<16x128xf32>
    %c0_3 = arith.constant 0 : index
    %c0_4 = arith.constant 0 : index
    %3 = vector.load %arg3[%c0_3, %c0_4] : memref<1x128xf32, #tpu.memory_space<vmem>>, vector<1x128xf32>
    %4 = vector.broadcast %3 : vector<1x128xf32> to vector<16x128xf32>
    %5 = arith.addf %2, %4 : vector<16x128xf32>
    %c0_5 = arith.constant 0 : index
    %c0_6 = arith.constant 0 : index
    %6 = vector.load %arg4[%c0_5, %c0_6] : memref<16x128xf32, #tpu.memory_space<vmem>>, vector<16x128xf32>
    tpu.vector_store %arg4[%c0_5, %c0_6], %5 {strides = array<i32>} : memref<16x128xf32, #tpu.memory_space<vmem>>, vector<16x128xf32>,
    return
  }
  func.func @transform_0(%arg0: i32) -> (i32, i32) {
    %c0_i32 = arith.constant 0 : i32
    %c0_i32_0 = arith.constant 0 : i32
    return %arg0, %c0_i32 : i32, i32
  }
  func.func @transform_1(%arg0: i32) -> (i32, i32) {
    %c0_i32 = arith.constant 0 : i32
    %c0_i32_0 = arith.constant 0 : i32
    %c0_i32_1 = arith.constant 0 : i32
    return %c0_i32, %c0_i32_0 : i32, i32
  }
  func.func @transform_2(%arg0: i32) -> (i32, i32) {
    %c0_i32 = arith.constant 0 : i32
    %c0_i32_0 = arith.constant 0 : i32
    %c0_i32_1 = arith.constant 0 : i32
    return %c0_i32, %c0_i32_0 : i32, i32
  }
  func.func @transform_3(%arg0: i32) -> (i32, i32) {
    %c0_i32 = arith.constant 0 : i32
    %c0_i32_0 = arith.constant 0 : i32
    return %arg0, %c0_i32 : i32, i32
  }
}

</mosaic_0001>

<llo_original>
// kernel: tpu_custom_call.1
$region0: #{tpu_custom_call.1}
  #allocation0 [shape = 'u32[]', space=smem, size = 0x4, offset = 0x4, fixed_abs, tag = 'smem constant byte address 0x4 - core index']
  #allocation1 [shape = 'u32[144,128]{1,0:T(1,128)}', space=vmem, size = 0x12000, scoped, tag = 'internal scratch']
  %s0 = inlined_call_operand.hbm [shape: bf16[16,128], index: 0, kind: input, shape index: {}]
  %s1 = inlined_call_operand.hbm [shape: bf16[128,128], index: 1, kind: input, shape index: {}]
  %s2 = inlined_call_operand.vmem [shape: f32[1,128], index: 2, kind: input, shape index: {}]
  %s3 = inlined_call_operand.hbm [shape: f32[16,128], index: 3, kind: output, shape index: {}]
  %s4 = sld [smem:[#allocation0]]
  $region30: #{tpu_custom_call.1} parent=0
    _
  %s6 = ssub.s32 1, %s4
  %s7 = scalar_select 0, %s6, %s4
  $region1: #{tpu_custom_call.1} parent=0
    #allocation2 [shape = 'u8[4096]{0}', space=vmem, size = 0x1000, scoped, tag = 'input window, operand 0, single buffered']
    #allocation3 [shape = 's32[1]{0}', space=sflag, size = 0x4, scoped, tag = 'scoped memory for tpu_custom_call.1']
    #allocation4 [shape = 's32[1]{0}', space=sflag, size = 0x4, scoped, tag = 'scoped memory for tpu_custom_call.1']
    #allocation5 [shape = 'u8[32768]{0}', space=vmem, size = 0x8000, scoped, tag = 'input window, operand 1, single buffered']
    #allocation6 [shape = 's32[1]{0}', space=sflag, size = 0x4, scoped, tag = 'scoped memory for tpu_custom_call.1']
    #allocation7 [shape = 'u8[8192]{0}', space=vmem, size = 0x2000, scoped, tag = 'output window, operand 0, single buffered']
    %8 = vsyncpa [#allocation3], 0
    %9 = vsyncpa [#allocation6], 0
    %10 = vsyncpa [#allocation4], 0
    // Predicated region
    $region2: #{tpu_custom_call.1} parent=1 // pred_check
      _
    $region3: #{tpu_custom_call.1} parent=1 // pred_check_branch
      %12 = sbr.rel (0) target = $region5
    $region4: #{tpu_custom_call.1} parent=1 // pred_region
      %s14 = ssub.s32 128, 128
      %15 = vsyncadd [#allocation3], %s14
      %s16 = sshll.u32 [#allocation2], 4
      %s17 = int_to_ptr.vmem [resolvable:$true] %s16
      %22 = dma.hbm_to_vmem [thread:$0]  %s0, 128, %s17, [#allocation3], 64, 64, 4
    $region5: #{tpu_custom_call.1} parent=1 // pred_fallthru
      _
    // Predicated region
    $region6: #{tpu_custom_call.1} parent=1 // pred_check
      _
    $region7: #{tpu_custom_call.1} parent=1 // pred_check_branch
      %24 = sbr.rel (0) target = $region9
    $region8: #{tpu_custom_call.1} parent=1 // pred_region
      %s26 = ssub.s32 1024, 1024
      %27 = vsyncadd [#allocation6], %s26
      %s28 = sshll.u32 [#allocation5], 4
      %s29 = int_to_ptr.vmem [resolvable:$true] %s28
      %34 = dma.hbm_to_vmem [thread:$0]  %s1, 1024, %s29, [#allocation6], 64, 64, 4
    $region9: #{tpu_custom_call.1} parent=1 // pred_fallthru
      _
    // Predicated region
    $region10: #{tpu_custom_call.1} parent=1 // pred_check
      _
    $region11: #{tpu_custom_call.1} parent=1 // pred_check_branch
      %36 = sbr.rel (0) target = $region13
    $region12: #{tpu_custom_call.1} parent=1 // pred_region
      _
    $region13: #{tpu_custom_call.1} parent=1 // pred_fallthru
      _
    // Predicated region
    $region14: #{tpu_custom_call.1} parent=1 // pred_check
      _
    $region15: #{tpu_custom_call.1} parent=1 // pred_check_branch
      %38 = sbr.rel (0) target = $region17
    $region16: #{tpu_custom_call.1} parent=1 // pred_region
      %39 = dma.done [#allocation3], 128
    $region17: #{tpu_custom_call.1} parent=1 // pred_fallthru
      _
    // Predicated region
    $region18: #{tpu_custom_call.1} parent=1 // pred_check
      _
    $region19: #{tpu_custom_call.1} parent=1 // pred_check_branch
      %41 = sbr.rel (0) target = $region21
    $region20: #{tpu_custom_call.1} parent=1 // pred_region
      %42 = dma.done [#allocation6], 1024
    $region21: #{tpu_custom_call.1} parent=1 // pred_fallthru
      _
    %v44 = vld [vmem:[#allocation2] sm:$0xf]
    %v45 = vld [vmem:[#allocation2 + $0x4] sm:$0xf]
    %v46 = vld [vmem:[#allocation5] sm:$0xf]
    %v47 = vld [vmem:[#allocation5 + $0x4] sm:$0xf]
    %v48 = vld [vmem:[#allocation5 + $0x8] sm:$0xf]
    %v49 = vld [vmem:[#allocation5 + $0xc] sm:$0xf]
    %v50 = vld [vmem:[#allocation5 + $0x10] sm:$0xf]
    %v51 = vld [vmem:[#allocation5 + $0x14] sm:$0xf]
    %v52 = vld [vmem:[#allocation5 + $0x18] sm:$0xf]
    %v53 = vld [vmem:[#allocation5 + $0x1c] sm:$0xf]
    %v54 = vld [vmem:[#allocation5 + $0x20] sm:$0xf]
    %v55 = vld [vmem:[#allocation5 + $0x24] sm:$0xf]
    %v56 = vld [vmem:[#allocation5 + $0x28] sm:$0xf]
    %v57 = vld [vmem:[#allocation5 + $0x2c] sm:$0xf]
    %v58 = vld [vmem:[#allocation5 + $0x30] sm:$0xf]
    %v59 = vld [vmem:[#allocation5 + $0x34] sm:$0xf]
    %v60 = vld [vmem:[#allocation5 + $0x38] sm:$0xf]
    %v61 = vld [vmem:[#allocation5 + $0x3c] sm:$0xf]
    %v62 = vld [vmem:[%s2] sm:$0x1]
    %v64 = vlaneseq
    %v65 = vshrl.u32 %v64, 7
    %v66 = vsub.s32 0, %v65
    %v67 = vrot.slane %v62, %v66
    %v71 = vunpack.c.l.b16 %v44
    %v72 = vunpack.c.l.b16 %v45
    %v73 = vpack.c.b16 %v72, %v71
    %v91 = vunpack.c.l.b16 %v46
    %v92 = vunpack.c.l.b16 %v47
    %v93 = vunpack.c.l.b16 %v48
    %v94 = vunpack.c.l.b16 %v49
    %v95 = vunpack.c.l.b16 %v50
    %v96 = vunpack.c.l.b16 %v51
    %v97 = vunpack.c.l.b16 %v52
    %v98 = vunpack.c.l.b16 %v53
    %v99 = vunpack.c.l.b16 %v54
    %v100 = vunpack.c.l.b16 %v55
    %v101 = vunpack.c.l.b16 %v56
    %v102 = vunpack.c.l.b16 %v57
    %v103 = vunpack.c.l.b16 %v58
    %v104 = vunpack.c.l.b16 %v59
    %v105 = vunpack.c.l.b16 %v60
    %v106 = vunpack.c.l.b16 %v61
    %v107 = vpack.c.b16 %v92, %v91
    %v108 = vpack.c.b16 %v94, %v93
    %v109 = vpack.c.b16 %v96, %v95
    %v110 = vpack.c.b16 %v98, %v97
    %v111 = vpack.c.b16 %v100, %v99
    %v112 = vpack.c.b16 %v102, %v101
    %v113 = vpack.c.b16 %v104, %v103
    %v114 = vpack.c.b16 %v106, %v105
    %123 = vmatprep.subr.bf16.mxu0 0
    %124 = vmatpush1.bf16.msra.mxu0 %v114
    %125 = vmatprep.subr.bf16.mxu0 0
    %126 = vmatpush1.bf16.msra.mxu0 %v113
    %127 = vmatprep.subr.bf16.mxu0 0
    %128 = vmatpush1.bf16.msra.mxu0 %v112
    %129 = vmatprep.subr.bf16.mxu0 0
    %130 = vmatpush1.bf16.msra.mxu0 %v111
    %131 = vmatprep.subr.bf16.mxu0 0
    %132 = vmatpush1.bf16.msra.mxu0 %v110
    %133 = vmatprep.subr.bf16.mxu0 0
    %134 = vmatpush1.bf16.msra.mxu0 %v109
    %135 = vmatprep.subr.bf16.mxu0 0
    %136 = vmatpush1.bf16.msra.mxu0 %v108
    %137 = vmatprep.subr.bf16.mxu0 0
    %138 = vmatpush1.bf16.msra.mxu0 %v107
    %139 = vmatprep.subr.bf16.mxu0 0
    %140 = vmatpush2.bf16.msra.mxu0 0
    %141 = vmatprep.subr.bf16.mxu0 0
    %142 = vmatpush2.bf16.msra.mxu0 0
    %143 = vmatprep.subr.bf16.mxu0 0
    %144 = vmatpush2.bf16.msra.mxu0 0
    %145 = vmatprep.subr.bf16.mxu0 0
    %146 = vmatpush2.bf16.msra.mxu0 0
    %147 = vmatprep.subr.bf16.mxu0 0
    %148 = vmatpush2.bf16.msra.mxu0 0
    %149 = vmatprep.subr.bf16.mxu0 0
    %150 = vmatpush2.bf16.msra.mxu0 0
    %151 = vmatprep.subr.bf16.mxu0 0
    %152 = vmatpush2.bf16.msra.mxu0 0
    %153 = vmatprep.subr.bf16.mxu0 0
    %154 = vmatpush2.bf16.msra.mxu0 0
    %155 = vmatprep.mubr.bf16.mxu0 0
    %156 = vmatmul.mubr.bf16.gmra.mxu0 %v73
    %v157 = vpop.f32.mrf.mxu0
    %v158 = vadd.f32 %v67, %v157
    %v159 = vpop.f32.mrf.mxu0
    %v160 = vpop.f32.mrf.mxu0
    %v161 = vadd.f32 %v67, %v160
    %v162 = vpop.f32.mrf.mxu0
    %163 = vdwg.mxu0
    %164 = vst [vmem:[#allocation7] sm:$0xff] %v158
    %165 = vst [vmem:[#allocation7 + $0x8] sm:$0xff] %v161
    // Predicated region
    $region22: #{tpu_custom_call.1} parent=1 // pred_check
      _
    $region23: #{tpu_custom_call.1} parent=1 // pred_check_branch
      %167 = sbr.rel (0) target = $region25
    $region24: #{tpu_custom_call.1} parent=1 // pred_region
      %s169 = ssub.s32 256, 256
      %170 = vsyncadd [#allocation4], %s169
      %s171 = sshll.u32 [#allocation7], 4
      %s172 = int_to_ptr.vmem [resolvable:$true] %s171
      %177 = dma.vmem_to_hbm [thread:$0]  %s172, 256, %s3, [#allocation4], 128, 128, 8
    $region25: #{tpu_custom_call.1} parent=1 // pred_fallthru
      _
    // Predicated region
    $region26: #{tpu_custom_call.1} parent=1 // pred_check
      _
    $region27: #{tpu_custom_call.1} parent=1 // pred_check_branch
      %179 = sbr.rel (0) target = $region29
    $region28: #{tpu_custom_call.1} parent=1 // pred_region
      %180 = dma.done [#allocation4], 256
    $region29: #{tpu_custom_call.1} parent=1 // pred_fallthru
      _
    %181 = vsyncpa [#allocation3], 1
    %182 = vsyncpa [#allocation6], 1
    %183 = vsyncpa [#allocation4], 1

</llo_original>
